<compile_context>
chip_gen: v6e
topology: v6e:2x2x1
jax: 0.10.0
libtpu: 0.0.40
codegen_flags: <defaults>
</compile_context>

<pallas_src>
import functools

import jax
import jax.numpy as jnp
from jax import lax
from jax.experimental import pallas as pl
from jax.experimental.pallas import tpu as pltpu

# Module hyper-parameters (from train_gpt.py)
N_EMBD = 384
BLOCK_SIZE = 256   # max context; we only use T <= BLOCK_SIZE
DROPOUT = 0.2      # TODO(synk): dropout is an eval-mode identity (no RNG masking)


def _head_kernel(x_ref, wqkv_ref, o_ref, *, scale, head_size):
    # x_ref:    (Bb, T, C)  bf16 VMEM tile (Bb batch elements per grid step)
    # wqkv_ref: (C, 3H)     bf16 fused [query | key | value] projection weights
    # o_ref:    (Bb, T, H)  f32 output tile
    Bb, T, C = x_ref.shape
    H = head_size

    # ---- fused QKV projection: one wide MXU matmul, f32 accumulation ----
    x2d = x_ref[...].reshape(Bb * T, C)                       # bf16, cheap reshape (T % 8 == 0)
    qkv = jnp.dot(x2d, wqkv_ref[...],
                  preferred_element_type=jnp.float32)         # (Bb*T, 3H) f32
    qkv = qkv.reshape(Bb, T, 3 * H)

    # Scale folded into q (T*H elements instead of T*T); bf16 for the MXU.
    q = (qkv[:, :, 0:H] * scale).astype(jnp.bfloat16)         # (Bb, T, H)
    k = qkv[:, :, H:2 * H].astype(jnp.bfloat16)               # (Bb, T, H)
    v = qkv[:, :, 2 * H:3 * H].astype(jnp.bfloat16)           # (Bb, T, H)

    # ---- attention scores: contraction over the head dim, no k.T transpose ----
    wei = jnp.einsum('bqh,bkh->bqk', q, k,
                     preferred_element_type=jnp.float32)      # (Bb, T, T) f32

    # Causal mask, computed once per grid step and shared by all Bb elements.
    row = lax.broadcasted_iota(jnp.int32, (T, T), 0)
    col = lax.broadcasted_iota(jnp.int32, (T, T), 1)
    causal = (col <= row)[None, :, :]
    wei = jnp.where(causal, wei, -jnp.inf)

    # Numerically stable softmax (every row contains its finite diagonal).
    wei = wei - jnp.max(wei, axis=-1, keepdims=True)
    p = jnp.exp(wei)
    p = p * pl.reciprocal(jnp.sum(p, axis=-1, keepdims=True), approx=True)

    # TODO(synk): dropout on `p` omitted (eval mode); training parity would need
    # pltpu.prng_seed + pltpu.prng_random_bits masking here.

    # ---- weighted sum of values ----
    out = jnp.einsum('bqk,bkh->bqh', p.astype(jnp.bfloat16), v,
                     preferred_element_type=jnp.float32)      # (Bb, T, H) f32
    o_ref[...] = out.astype(o_ref.dtype)


def _pick_batch_block(B, cap=8):
    """Largest divisor of B not exceeding `cap` (batch elements per grid step)."""
    for bb in range(min(B, cap), 0, -1):
        if B % bb == 0:
            return bb
    return 1


def head_forward(x, w_key, w_query, w_value, *, batch_block=None):
    """x: (B, T, C); w_*: (C, H) (already transposed).  Returns (B, T, H)."""
    B, T, C = x.shape
    H = w_key.shape[1]
    assert C == N_EMBD and T <= BLOCK_SIZE
    assert T % 8 == 0, "T must be a multiple of 8 (sublane tiling / cheap reshape)"

    Bb = _pick_batch_block(B) if batch_block is None else batch_block
    assert B % Bb == 0

    scale = float(H) ** -0.5
    out_dtype = x.dtype

    # Fuse the three projections into one (C, 3H) weight; bf16 MXU path
    # (halves the x DMA bytes, full f32 accumulation inside the kernel).
    w_qkv = jnp.concatenate([w_query, w_key, w_value], axis=1).astype(jnp.bfloat16)
    x_bf16 = x.astype(jnp.bfloat16)

    kernel = functools.partial(_head_kernel, scale=scale, head_size=H)

    return pl.pallas_call(
        kernel,
        out_shape=jax.ShapeDtypeStruct((B, T, H), out_dtype),
        grid_spec=pltpu.PrefetchScalarGridSpec(
            num_scalar_prefetch=0,
            grid=(B // Bb,),
            in_specs=[
                pl.BlockSpec((Bb, T, C), lambda b: (b, 0, 0)),     # x batch block
                pl.BlockSpec((C, 3 * H), lambda b: (0, 0)),         # fused W_qkv
            ],
            out_specs=pl.BlockSpec((Bb, T, H), lambda b: (b, 0, 0)),
        ),
        compiler_params=pltpu.CompilerParams(
            dimension_semantics=("parallel",),        # shards across TCs on v7x
            vmem_limit_bytes=32 * 1024 * 1024,        # > v5e's 16 MiB scoped default
        ),
    )(x_bf16, w_qkv)


def head_reference(x, w_key, w_query, w_value):
    """Pure-JAX f32 reference matching the PyTorch forward (eval mode)."""
    B, T, C = x.shape
    H = w_key.shape[1]
    k = x @ w_key
    q = x @ w_query
    v = x @ w_value
    wei = (q @ jnp.swapaxes(k, -2, -1)) * (H ** -0.5)
    mask = jnp.tril(jnp.ones((T, T), bool))
    wei = jnp.where(mask[None], wei, -jnp.inf)
    wei = jax.nn.softmax(wei, axis=-1)
    return wei @ v


if __name__ == "__main__":
    # Small deterministic example consistent with the module:
    # B=2 batches, T=8 tokens, C=n_embd=384, head_size=64.
    B, T, C, HEAD_SIZE = 2, 8, N_EMBD, 64

    key = jax.random.PRNGKey(0)
    kx, kk, kq, kv = jax.random.split(key, 4)

    x = jax.random.normal(kx, (B, T, C), dtype=jnp.float32)
    # nn.Linear(n_embd, head_size, bias=False) weight is (head_size, n_embd);
    # we store the transposed (n_embd, head_size) version for the kernel.
    w_key = (jax.random.normal(kk, (HEAD_SIZE, C), dtype=jnp.float32) * (C ** -0.5)).T
    w_query = (jax.random.normal(kq, (HEAD_SIZE, C), dtype=jnp.float32) * (C ** -0.5)).T
    w_value = (jax.random.normal(kv, (HEAD_SIZE, C), dtype=jnp.float32) * (C ** -0.5)).T

    out = head_forward(x, w_key, w_query, w_value)
    out = jax.block_until_ready(out)

    ref = head_reference(x, w_key, w_query, w_value)
    assert out.shape == (B, T, HEAD_SIZE)
    # bf16 MXU path + approx reciprocal -> looser tolerance than pure f32.
    assert jnp.allclose(out, ref, atol=5e-2, rtol=5e-2), "mismatch vs reference"

    print("KERNEL_OK")
</pallas_src>

<mosaic_0001>
module attributes {stable_mosaic.version = 11 : i64} {
  func.func @_head_kernel(%arg0: i32, %arg1: memref<2x8x384xbf16, #tpu.memory_space<vmem>>, %arg2: memref<384x192xbf16, #tpu.memory_space<vmem>>, %arg3: memref<2x8x64xf32, #tpu.memory_space<vmem>>) attributes {dimension_semantics = [#tpu.dimension_semantics<parallel>], iteration_bounds = array<i64: 1>, scalar_prefetch = 0 : i64, scratch_operands = 0 : i64, tpu.core_type = #tpu.core_type<tc>, window_params = [{transform_indices = @transform_0, window_bounds = array<i64: 2, 8, 384>}, {pipeline_mode = #tpu.pipeline_mode<synchronous>, transform_indices = @transform_1, window_bounds = array<i64: 384, 192>}, {transform_indices = @transform_2, window_bounds = array<i64: 2, 8, 64>}]} {
    %c0 = arith.constant 0 : index
    %c0_0 = arith.constant 0 : index
    %c0_1 = arith.constant 0 : index
    %0 = vector.load %arg1[%c0, %c0_0, %c0_1] : memref<2x8x384xbf16, #tpu.memory_space<vmem>>, vector<2x8x384xbf16>
    %1 = vector.shape_cast %0 : vector<2x8x384xbf16> to vector<16x384xbf16>
    %c0_2 = arith.constant 0 : index
    %c0_3 = arith.constant 0 : index
    %2 = vector.load %arg2[%c0_2, %c0_3] : memref<384x192xbf16, #tpu.memory_space<vmem>>, vector<384x192xbf16>
    %cst = arith.constant dense<0.000000e+00> : vector<16x192xf32>
    %3 = tpu.matmul %1, %2, %cst {dimension_numbers = #tpu.dot_dimension_numbers<[1], [0], [0], [1], [0, 0, 1, 1], [], []>} : vector<16x384xbf16>, vector<384x192xbf16>, vector<16x192xf32> -> vector<16x192xf32>
    %4 = vector.shape_cast %3 : vector<16x192xf32> to vector<2x8x192xf32>
    %5 = vector.extract_strided_slice %4 {offsets = [0, 0, 0], sizes = [2, 8, 64], strides = [1, 1, 1]} : vector<2x8x192xf32> to vector<2x8x64xf32>
    %cst_4 = arith.constant 1.250000e-01 : f32
    %6 = vector.broadcast %cst_4 : f32 to vector<2x8x64xf32>
    %7 = arith.mulf %5, %6 : vector<2x8x64xf32>
    %8 = arith.truncf %7 : vector<2x8x64xf32> to vector<2x8x64xbf16>
    %9 = vector.extract_strided_slice %4 {offsets = [0, 0, 64], sizes = [2, 8, 64], strides = [1, 1, 1]} : vector<2x8x192xf32> to vector<2x8x64xf32>
    %10 = arith.truncf %9 : vector<2x8x64xf32> to vector<2x8x64xbf16>
    %11 = vector.extract_strided_slice %4 {offsets = [0, 0, 128], sizes = [2, 8, 64], strides = [1, 1, 1]} : vector<2x8x192xf32> to vector<2x8x64xf32>
    %12 = arith.truncf %11 : vector<2x8x64xf32> to vector<2x8x64xbf16>
    "tpu.trace_start"() <{level = 10 : i32, message = "bqh,bkh->bqk"}> : () -> ()
    %cst_5 = arith.constant dense<0.000000e+00> : vector<2x8x8xf32>
    %13 = tpu.matmul %8, %10, %cst_5 {dimension_numbers = #tpu.dot_dimension_numbers<[2], [2], [1], [1], [0, 0, 0, 1, 1, 1], [0], [0]>} : vector<2x8x64xbf16>, vector<2x8x64xbf16>, vector<2x8x8xf32> -> vector<2x8x8xf32>
    "tpu.trace_stop"() : () -> ()
    %14 = tpu.iota {dimensions = array<i32: 0>} : vector<8x8xi32>
    %15 = tpu.iota {dimensions = array<i32: 1>} : vector<8x8xi32>
    %16 = arith.cmpi sle, %15, %14 : vector<8x8xi32>
    %17 = vector.shape_cast %16 : vector<8x8xi1> to vector<1x8x8xi1>
    %cst_6 = arith.constant 0xFF800000 : f32
    %18 = vector.shape_cast %17 : vector<1x8x8xi1> to vector<1x8x8xi1>
    %19 = vector.broadcast %18 : vector<1x8x8xi1> to vector<2x8x8xi1>
    %20 = vector.broadcast %cst_6 : f32 to vector<2x8x8xf32>
    %21 = arith.select %19, %13, %20 : vector<2x8x8xi1>, vector<2x8x8xf32>
    %cst_7 = arith.constant dense<0xFF800000> : vector<2x8xf32>
    %22 = vector.multi_reduction <maximumf>, %21, %cst_7 [2] : vector<2x8x8xf32> to vector<2x8xf32>
    %23 = vector.shape_cast %22 : vector<2x8xf32> to vector<2x8x1xf32>
    %24 = vector.broadcast %23 : vector<2x8x1xf32> to vector<2x8x8xf32>
    %25 = arith.subf %21, %24 : vector<2x8x8xf32>
    %26 = math.exp %25 : vector<2x8x8xf32>
    %cst_8 = arith.constant dense<0.000000e+00> : vector<2x8xf32>
    %27 = vector.multi_reduction <add>, %26, %cst_8 [2] : vector<2x8x8xf32> to vector<2x8xf32>
    %28 = vector.shape_cast %27 : vector<2x8xf32> to vector<2x8x1xf32>
    %29 = tpu.reciprocal %28 {approx = true} : vector<2x8x1xf32> -> vector<2x8x1xf32>
    %30 = vector.broadcast %29 : vector<2x8x1xf32> to vector<2x8x8xf32>
    %31 = arith.mulf %26, %30 : vector<2x8x8xf32>
    %32 = arith.truncf %31 : vector<2x8x8xf32> to vector<2x8x8xbf16>
    "tpu.trace_start"() <{level = 10 : i32, message = "bqk,bkh->bqh"}> : () -> ()
    %cst_9 = arith.constant dense<0.000000e+00> : vector<2x8x64xf32>
    %33 = tpu.matmul %32, %12, %cst_9 {dimension_numbers = #tpu.dot_dimension_numbers<[2], [1], [1], [2], [0, 0, 0, 1, 1, 2], [0], [0]>} : vector<2x8x8xbf16>, vector<2x8x64xbf16>, vector<2x8x64xf32> -> vector<2x8x64xf32>
    "tpu.trace_stop"() : () -> ()
    %c0_10 = arith.constant 0 : index
    %c0_11 = arith.constant 0 : index
    %c0_12 = arith.constant 0 : index
    %34 = vector.load %arg3[%c0_10, %c0_11, %c0_12] : memref<2x8x64xf32, #tpu.memory_space<vmem>>, vector<2x8x64xf32>
    tpu.vector_store %arg3[%c0_10, %c0_11, %c0_12], %33 {strides = array<i32>} : memref<2x8x64xf32, #tpu.memory_space<vmem>>, vector<2x8x64xf32>,
    return
  }
  func.func @transform_0(%arg0: i32) -> (i32, i32, i32) {
    %c0_i32 = arith.constant 0 : i32
    %c0_i32_0 = arith.constant 0 : i32
    %c0_i32_1 = arith.constant 0 : i32
    return %arg0, %c0_i32, %c0_i32_0 : i32, i32, i32
  }
  func.func @transform_1(%arg0: i32) -> (i32, i32) {
    %c0_i32 = arith.constant 0 : i32
    %c0_i32_0 = arith.constant 0 : i32
    %c0_i32_1 = arith.constant 0 : i32
    return %c0_i32, %c0_i32_0 : i32, i32
  }
  func.func @transform_2(%arg0: i32) -> (i32, i32, i32) {
    %c0_i32 = arith.constant 0 : i32
    %c0_i32_0 = arith.constant 0 : i32
    %c0_i32_1 = arith.constant 0 : i32
    return %arg0, %c0_i32, %c0_i32_0 : i32, i32, i32
  }
}

</mosaic_0001>

<llo_original>
// kernel: tpu_custom_call.1
$region0: #{tpu_custom_call.1}
  #allocation0 [shape = 'u32[]', space=smem, size = 0x4, offset = 0x4, fixed_abs, tag = 'smem constant byte address 0x4 - core index']
  #allocation1 [shape = 'u32[144,128]{1,0:T(1,128)}', space=vmem, size = 0x12000, scoped, tag = 'internal scratch']
  %s0 = inlined_call_operand.vmem [shape: bf16[2,8,384], index: 0, kind: input, shape index: {}]
  %s1 = inlined_call_operand.vmem [shape: bf16[384,192], index: 1, kind: input, shape index: {}]
  %s2 = inlined_call_operand.hbm [shape: f32[2,8,64], index: 2, kind: output, shape index: {}]
  %s3 = sld [smem:[#allocation0]]
  $region18: #{tpu_custom_call.1} parent=0
    _
  %s5 = ssub.s32 1, %s3
  %s6 = scalar_select 0, %s5, %s3
  $region1: #{tpu_custom_call.1} parent=0
    #allocation2 [shape = 'u8[8192]{0}', space=vmem, size = 0x2000, scoped, tag = 'output window, operand 0, single buffered']
    #allocation3 [shape = 's32[1]{0}', space=sflag, size = 0x4, scoped, tag = 'scoped memory for tpu_custom_call.1']
    %7 = vsyncpa [#allocation3], 0
    // Predicated region
    $region2: #{tpu_custom_call.1} parent=1 // pred_check
      _
    $region3: #{tpu_custom_call.1} parent=1 // pred_check_branch
      %9 = sbr.rel (0) target = $region5
    $region4: #{tpu_custom_call.1} parent=1 // pred_region
      _
    $region5: #{tpu_custom_call.1} parent=1 // pred_fallthru
      _
    // Predicated region
    $region6: #{tpu_custom_call.1} parent=1 // pred_check
      _
    $region7: #{tpu_custom_call.1} parent=1 // pred_check_branch
      %11 = sbr.rel (0) target = $region9
    $region8: #{tpu_custom_call.1} parent=1 // pred_region
      _
    $region9: #{tpu_custom_call.1} parent=1 // pred_fallthru
      _
    %v13 = vld [vmem:[%s0] sm:$0xff]
    %v14 = vld [vmem:[%s0 + $0x8] sm:$0xf]
    %v15 = vld [vmem:[%s0 + $0xc] sm:$0xff]
    %v16 = vld [vmem:[%s0 + $0x14] sm:$0xf]
    %v17 = vld [vmem:[%s1] sm:$0xff]
    %v18 = vld [vmem:[%s1 + $0x8] sm:$0xff]
    %v19 = vld [vmem:[%s1 + $0x10] sm:$0xff]
    %v20 = vld [vmem:[%s1 + $0x18] sm:$0xff]
    %v21 = vld [vmem:[%s1 + $0x20] sm:$0xff]
    %v22 = vld [vmem:[%s1 + $0x28] sm:$0xff]
    %v23 = vld [vmem:[%s1 + $0x30] sm:$0xff]
    %v24 = vld [vmem:[%s1 + $0x38] sm:$0xff]
    %v25 = vld [vmem:[%s1 + $0x40] sm:$0xff]
    %v26 = vld [vmem:[%s1 + $0x48] sm:$0xff]
    %v27 = vld [vmem:[%s1 + $0x50] sm:$0xff]
    %v28 = vld [vmem:[%s1 + $0x58] sm:$0xff]
    %v29 = vld [vmem:[%s1 + $0x60] sm:$0xff]
    %v30 = vld [vmem:[%s1 + $0x68] sm:$0xff]
    %v31 = vld [vmem:[%s1 + $0x70] sm:$0xff]
    %v32 = vld [vmem:[%s1 + $0x78] sm:$0xff]
    %v33 = vld [vmem:[%s1 + $0x80] sm:$0xff]
    %v34 = vld [vmem:[%s1 + $0x88] sm:$0xff]
    %v35 = vld [vmem:[%s1 + $0x90] sm:$0xff]
    %v36 = vld [vmem:[%s1 + $0x98] sm:$0xff]
    %v37 = vld [vmem:[%s1 + $0xa0] sm:$0xff]
    %v38 = vld [vmem:[%s1 + $0xa8] sm:$0xff]
    %v39 = vld [vmem:[%s1 + $0xb0] sm:$0xff]
    %v40 = vld [vmem:[%s1 + $0xb8] sm:$0xff]
    %v41 = vld [vmem:[%s1 + $0xc0] sm:$0xff]
    %v42 = vld [vmem:[%s1 + $0xc8] sm:$0xff]
    %v43 = vld [vmem:[%s1 + $0xd0] sm:$0xff]
    %v44 = vld [vmem:[%s1 + $0xd8] sm:$0xff]
    %v45 = vld [vmem:[%s1 + $0xe0] sm:$0xff]
    %v46 = vld [vmem:[%s1 + $0xe8] sm:$0xff]
    %v47 = vld [vmem:[%s1 + $0xf0] sm:$0xff]
    %v48 = vld [vmem:[%s1 + $0xf8] sm:$0xff]
    %v49 = vld [vmem:[%s1 + $0x100] sm:$0xff]
    %v50 = vld [vmem:[%s1 + $0x108] sm:$0xff]
    %v51 = vld [vmem:[%s1 + $0x110] sm:$0xff]
    %v52 = vld [vmem:[%s1 + $0x118] sm:$0xff]
    %v53 = vld [vmem:[%s1 + $0x120] sm:$0xff]
    %v54 = vld [vmem:[%s1 + $0x128] sm:$0xff]
    %v55 = vld [vmem:[%s1 + $0x130] sm:$0xff]
    %v56 = vld [vmem:[%s1 + $0x138] sm:$0xff]
    %v57 = vld [vmem:[%s1 + $0x140] sm:$0xff]
    %v58 = vld [vmem:[%s1 + $0x148] sm:$0xff]
    %v59 = vld [vmem:[%s1 + $0x150] sm:$0xff]
    %v60 = vld [vmem:[%s1 + $0x158] sm:$0xff]
    %v61 = vld [vmem:[%s1 + $0x160] sm:$0xff]
    %v62 = vld [vmem:[%s1 + $0x168] sm:$0xff]
    %v63 = vld [vmem:[%s1 + $0x170] sm:$0xff]
    %v64 = vld [vmem:[%s1 + $0x178] sm:$0xff]
    %v69 = vunpack.c.l.b16 %v13
    %v70 = vunpack.c.h.b16 %v13
    %v71 = vunpack.c.l.b16 %v14
    %v72 = vunpack.c.l.b16 %v15
    %v73 = vunpack.c.h.b16 %v15
    %v74 = vunpack.c.l.b16 %v16
    %v75 = vpack.c.b16 %v72, %v69
    %v76 = vpack.c.b16 %v73, %v70
    %v77 = vpack.c.b16 %v74, %v71
    %v129 = vunpack.c.l.b16 %v17
    %v130 = vunpack.c.h.b16 %v17
    %v131 = vunpack.c.l.b16 %v18
    %v132 = vunpack.c.h.b16 %v18
    %v133 = vunpack.c.l.b16 %v19
    %v134 = vunpack.c.h.b16 %v19
    %v135 = vunpack.c.l.b16 %v20
    %v136 = vunpack.c.h.b16 %v20
    %v137 = vunpack.c.l.b16 %v21
    %v138 = vunpack.c.h.b16 %v21
    %v139 = vunpack.c.l.b16 %v22
    %v140 = vunpack.c.h.b16 %v22
    %v141 = vunpack.c.l.b16 %v23
    %v142 = vunpack.c.h.b16 %v23
    %v143 = vunpack.c.l.b16 %v24
    %v144 = vunpack.c.h.b16 %v24
    %v145 = vunpack.c.l.b16 %v25
    %v146 = vunpack.c.h.b16 %v25
    %v147 = vunpack.c.l.b16 %v26
    %v148 = vunpack.c.h.b16 %v26
    %v149 = vunpack.c.l.b16 %v27
    %v150 = vunpack.c.h.b16 %v27
    %v151 = vunpack.c.l.b16 %v28
    %v152 = vunpack.c.h.b16 %v28
    %v153 = vunpack.c.l.b16 %v29
    %v154 = vunpack.c.h.b16 %v29
    %v155 = vunpack.c.l.b16 %v30
    %v156 = vunpack.c.h.b16 %v30
    %v157 = vunpack.c.l.b16 %v31
    %v158 = vunpack.c.h.b16 %v31
    %v159 = vunpack.c.l.b16 %v32
    %v160 = vunpack.c.h.b16 %v32
    %v161 = vunpack.c.l.b16 %v33
    %v162 = vunpack.c.h.b16 %v33
    %v163 = vunpack.c.l.b16 %v34
    %v164 = vunpack.c.h.b16 %v34
    %v165 = vunpack.c.l.b16 %v35
    %v166 = vunpack.c.h.b16 %v35
    %v167 = vunpack.c.l.b16 %v36
    %v168 = vunpack.c.h.b16 %v36
    %v169 = vunpack.c.l.b16 %v37
    %v170 = vunpack.c.h.b16 %v37
    %v171 = vunpack.c.l.b16 %v38
    %v172 = vunpack.c.h.b16 %v38
    %v173 = vunpack.c.l.b16 %v39
    %v174 = vunpack.c.h.b16 %v39
    %v175 = vunpack.c.l.b16 %v40
    %v176 = vunpack.c.h.b16 %v40
    %v177 = vunpack.c.l.b16 %v41
    %v178 = vunpack.c.h.b16 %v41
    %v179 = vunpack.c.l.b16 %v42
    %v180 = vunpack.c.h.b16 %v42
    %v181 = vunpack.c.l.b16 %v43
    %v182 = vunpack.c.h.b16 %v43
    %v183 = vunpack.c.l.b16 %v44
    %v184 = vunpack.c.h.b16 %v44
    %v185 = vunpack.c.l.b16 %v45
    %v186 = vunpack.c.h.b16 %v45
    %v187 = vunpack.c.l.b16 %v46
    %v188 = vunpack.c.h.b16 %v46
    %v189 = vunpack.c.l.b16 %v47
    %v190 = vunpack.c.h.b16 %v47
    %v191 = vunpack.c.l.b16 %v48
    %v192 = vunpack.c.h.b16 %v48
    %v193 = vunpack.c.l.b16 %v49
    %v194 = vunpack.c.h.b16 %v49
    %v195 = vunpack.c.l.b16 %v50
    %v196 = vunpack.c.h.b16 %v50
    %v197 = vunpack.c.l.b16 %v51
    %v198 = vunpack.c.h.b16 %v51
    %v199 = vunpack.c.l.b16 %v52
    %v200 = vunpack.c.h.b16 %v52
    %v201 = vunpack.c.l.b16 %v53
    %v202 = vunpack.c.h.b16 %v53
    %v203 = vunpack.c.l.b16 %v54
    %v204 = vunpack.c.h.b16 %v54
    %v205 = vunpack.c.l.b16 %v55
    %v206 = vunpack.c.h.b16 %v55
    %v207 = vunpack.c.l.b16 %v56
    %v208 = vunpack.c.h.b16 %v56
    %v209 = vunpack.c.l.b16 %v57
    %v210 = vunpack.c.h.b16 %v57
    %v211 = vunpack.c.l.b16 %v58
    %v212 = vunpack.c.h.b16 %v58
    %v213 = vunpack.c.l.b16 %v59
    %v214 = vunpack.c.h.b16 %v59
    %v215 = vunpack.c.l.b16 %v60
    %v216 = vunpack.c.h.b16 %v60
    %v217 = vunpack.c.l.b16 %v61
    %v218 = vunpack.c.h.b16 %v61
    %v219 = vunpack.c.l.b16 %v62
    %v220 = vunpack.c.h.b16 %v62
    %v221 = vunpack.c.l.b16 %v63
    %v222 = vunpack.c.h.b16 %v63
    %v223 = vunpack.c.l.b16 %v64
    %v224 = vunpack.c.h.b16 %v64
    %v225 = vpack.c.b16 %v131, %v129
    %v226 = vpack.c.b16 %v132, %v130
    %v227 = vpack.c.b16 %v135, %v133
    %v228 = vpack.c.b16 %v136, %v134
    %v229 = vpack.c.b16 %v139, %v137
    %v230 = vpack.c.b16 %v140, %v138
    %v231 = vpack.c.b16 %v143, %v141
    %v232 = vpack.c.b16 %v144, %v142
    %v233 = vpack.c.b16 %v147, %v145
    %v234 = vpack.c.b16 %v148, %v146
    %v235 = vpack.c.b16 %v151, %v149
    %v236 = vpack.c.b16 %v152, %v150
    %v237 = vpack.c.b16 %v155, %v153
    %v238 = vpack.c.b16 %v156, %v154
    %v239 = vpack.c.b16 %v159, %v157
    %v240 = vpack.c.b16 %v160, %v158
    %v241 = vpack.c.b16 %v163, %v161
    %v242 = vpack.c.b16 %v164, %v162
    %v243 = vpack.c.b16 %v167, %v165
    %v244 = vpack.c.b16 %v168, %v166
    %v245 = vpack.c.b16 %v171, %v169
    %v246 = vpack.c.b16 %v172, %v170
    %v247 = vpack.c.b16 %v175, %v173
    %v248 = vpack.c.b16 %v176, %v174
    %v249 = vpack.c.b16 %v179, %v177
    %v250 = vpack.c.b16 %v180, %v178
    %v251 = vpack.c.b16 %v183, %v181
    %v252 = vpack.c.b16 %v184, %v182
    %v253 = vpack.c.b16 %v187, %v185
    %v254 = vpack.c.b16 %v188, %v186
    %v255 = vpack.c.b16 %v191, %v189
    %v256 = vpack.c.b16 %v192, %v190
    %v257 = vpack.c.b16 %v195, %v193
    %v258 = vpack.c.b16 %v196, %v194
    %v259 = vpack.c.b16 %v199, %v197
    %v260 = vpack.c.b16 %v200, %v198
    %v261 = vpack.c.b16 %v203, %v201
    %v262 = vpack.c.b16 %v204, %v202
    %v263 = vpack.c.b16 %v207, %v205
    %v264 = vpack.c.b16 %v208, %v206
    %v265 = vpack.c.b16 %v211, %v209
    %v266 = vpack.c.b16 %v212, %v210
    %v267 = vpack.c.b16 %v215, %v213
    %v268 = vpack.c.b16 %v216, %v214
    %v269 = vpack.c.b16 %v219, %v217
    %v270 = vpack.c.b16 %v220, %v218
    %v271 = vpack.c.b16 %v223, %v221
    %v272 = vpack.c.b16 %v224, %v222
    %321 = vmatprep.subr.bf16.mxu0 %v240
    %322 = vmatpush1.bf16.msra.mxu0 %v239
    %323 = vmatprep.subr.bf16.mxu0 %v238
    %324 = vmatpush1.bf16.msra.mxu0 %v237
    %325 = vmatprep.subr.bf16.mxu0 %v236
    %326 = vmatpush1.bf16.msra.mxu0 %v235
    %327 = vmatprep.subr.bf16.mxu0 %v234
    %328 = vmatpush1.bf16.msra.mxu0 %v233
    %329 = vmatprep.subr.bf16.mxu0 %v232
    %330 = vmatpush1.bf16.msra.mxu0 %v231
    %331 = vmatprep.subr.bf16.mxu0 %v230
    %332 = vmatpush1.bf16.msra.mxu0 %v229
    %333 = vmatprep.subr.bf16.mxu0 %v228
    %334 = vmatpush1.bf16.msra.mxu0 %v227
    %335 = vmatprep.subr.bf16.mxu0 %v226
    %336 = vmatpush1.bf16.msra.mxu0 %v225
    %337 = vmatprep.subr.bf16.mxu0 %v256
    %338 = vmatpush2.bf16.msra.mxu0 %v255
    %339 = vmatprep.subr.bf16.mxu0 %v254
    %340 = vmatpush2.bf16.msra.mxu0 %v253
    %341 = vmatprep.subr.bf16.mxu0 %v252
    %342 = vmatpush2.bf16.msra.mxu0 %v251
    %343 = vmatprep.subr.bf16.mxu0 %v250
    %344 = vmatpush2.bf16.msra.mxu0 %v249
    %345 = vmatprep.subr.bf16.mxu0 %v248
    %346 = vmatpush2.bf16.msra.mxu0 %v247
    %347 = vmatprep.subr.bf16.mxu0 %v246
    %348 = vmatpush2.bf16.msra.mxu0 %v245
    %349 = vmatprep.subr.bf16.mxu0 %v244
    %350 = vmatpush2.bf16.msra.mxu0 %v243
    %351 = vmatprep.subr.bf16.mxu0 %v242
    %352 = vmatpush2.bf16.msra.mxu0 %v241
    %353 = vmatprep.mubr.bf16.mxu0 %v76
    %354 = vmatmul.mubr.bf16.gmra.mxu0 %v75
    %v355 = vpop.f32.mrf.mxu0
    %v356 = vadd.f32 0.0, %v355
    %v357 = vpop.f32.mrf.mxu0
    %v358 = vadd.f32 0.0, %v357
    %v359 = vpop.f32.mrf.mxu0
    %v360 = vadd.f32 0.0, %v359
    %v361 = vpop.f32.mrf.mxu0
    %v362 = vadd.f32 0.0, %v361
    %363 = vdwg.mxu0
    %364 = vmatprep.subr.bf16.mxu0 %v272
    %365 = vmatpush1.bf16.msra.mxu0 %v271
    %366 = vmatprep.subr.bf16.mxu0 %v270
    %367 = vmatpush1.bf16.msra.mxu0 %v269
    %368 = vmatprep.subr.bf16.mxu0 %v268
    %369 = vmatpush1.bf16.msra.mxu0 %v267
    %370 = vmatprep.subr.bf16.mxu0 %v266
    %371 = vmatpush1.bf16.msra.mxu0 %v265
    %372 = vmatprep.subr.bf16.mxu0 %v264
    %373 = vmatpush1.bf16.msra.mxu0 %v263
    %374 = vmatprep.subr.bf16.mxu0 %v262
    %375 = vmatpush1.bf16.msra.mxu0 %v261
    %376 = vmatprep.subr.bf16.mxu0 %v260
    %377 = vmatpush1.bf16.msra.mxu0 %v259
    %378 = vmatprep.subr.bf16.mxu0 %v258
    %379 = vmatpush1.bf16.msra.mxu0 %v257
    %380 = vmatprep.subr.bf16.mxu0 0
    %381 = vmatpush2.bf16.msra.mxu0 0
    %382 = vmatprep.subr.bf16.mxu0 0
    %383 = vmatpush2.bf16.msra.mxu0 0
    %384 = vmatprep.subr.bf16.mxu0 0
    %385 = vmatpush2.bf16.msra.mxu0 0
    %386 = vmatprep.subr.bf16.mxu0 0
    %387 = vmatpush2.bf16.msra.mxu0 0
    %388 = vmatprep.subr.bf16.mxu0 0
    %389 = vmatpush2.bf16.msra.mxu0 0
    %390 = vmatprep.subr.bf16.mxu0 0
    %391 = vmatpush2.bf16.msra.mxu0 0
    %392 = vmatprep.subr.bf16.mxu0 0
    %393 = vmatpush2.bf16.msra.mxu0 0
    %394 = vmatprep.subr.bf16.mxu0 0
    %395 = vmatpush2.bf16.msra.mxu0 0
    %396 = vmatprep.mubr.bf16.mxu0 0
    %397 = vmatmul.mubr.bf16.gmra.mxu0 %v77
    %v398 = vpop.f32.mrf.mxu0
    %v399 = vadd.f32 %v356, %v398
    %v400 = vpop.f32.mrf.mxu0
    %v401 = vadd.f32 %v358, %v400
    %v402 = vpop.f32.mrf.mxu0
    %v403 = vadd.f32 %v360, %v402
    %v404 = vpop.f32.mrf.mxu0
    %v405 = vadd.f32 %v362, %v404
    %406 = vdwg.mxu0
    %v407 = vmul.f32 %v399, 0.125
    %v408 = vmul.f32 %v403, 0.125
    %v409 = vpack.c.bf16 %v407, %v407
    %v410 = vpack.c.bf16 %v408, %v408
    %v411 = vpack.c.bf16 %v399, %v399
    %v412 = vpack.c.bf16 %v403, %v403
    %v413 = vpack.c.bf16 %v401, %v401
    %v414 = vpack.c.bf16 %v405, %v405
    %416 = vrot.lane.b32.xlu0 %v411, 64
    %v417 = vpop.permute.xlu0 %416
    %vm418 = vcmask 523264
    %v420 = vsel %vm418, %v409, 0
    %v423 = vsel %vm418, %v417, 0
    %425 = vmatprep.subr.bf16.mxu0 0
    %426 = vmatpush1.bf16.xpose.msra.mxu0 0
    %427 = vmatprep.subr.bf16.mxu0 0
    %428 = vmatpush1.bf16.xpose.msra.mxu0 0
    %429 = vmatprep.subr.bf16.mxu0 0
    %430 = vmatpush1.bf16.xpose.msra.mxu0 0
    %431 = vmatprep.subr.bf16.mxu0 0
    %432 = vmatpush1.bf16.xpose.msra.mxu0 0
    %433 = vmatprep.subr.bf16.mxu0 0
    %434 = vmatpush1.bf16.xpose.msra.mxu0 0
    %435 = vmatprep.subr.bf16.mxu0 0
    %436 = vmatpush1.bf16.xpose.msra.mxu0 0
    %437 = vmatprep.subr.bf16.mxu0 0
    %438 = vmatpush1.bf16.xpose.msra.mxu0 0
    %439 = vmatprep.subr.bf16.mxu0 0
    %440 = vmatpush1.bf16.xpose.msra.mxu0 %v423
    %441 = vmatprep.subr.bf16.mxu0 0
    %442 = vmatpush2.bf16.xpose.msra.mxu0 0
    %443 = vmatprep.subr.bf16.mxu0 0
    %444 = vmatpush2.bf16.xpose.msra.mxu0 0
    %445 = vmatprep.subr.bf16.mxu0 0
    %446 = vmatpush2.bf16.xpose.msra.mxu0 0
    %447 = vmatprep.subr.bf16.mxu0 0
    %448 = vmatpush2.bf16.xpose.msra.mxu0 0
    %449 = vmatprep.subr.bf16.mxu0 0
    %450 = vmatpush2.bf16.xpose.msra.mxu0 0
    %451 = vmatprep.subr.bf16.mxu0 0
    %452 = vmatpush2.bf16.xpose.msra.mxu0 0
    %453 = vmatprep.subr.bf16.mxu0 0
    %454 = vmatpush2.bf16.xpose.msra.mxu0 0
    %455 = vmatprep.subr.bf16.mxu0 0
    %456 = vmatpush2.bf16.xpose.msra.mxu0 0
    %457 = vmatprep.mubr.bf16.mxu0 0
    %458 = vmatmul.mubr.bf16.gmra.mxu0 %v420
    %v459 = vpop.f32.mrf.mxu0
    %v460 = vadd.f32 0.0, %v459
    %v461 = vpop.f32.mrf.mxu0
    %v462 = vpop.f32.mrf.mxu0
    %v463 = vpop.f32.mrf.mxu0
    %464 = vdwg.mxu0
    %466 = vrot.lane.b32.xlu0 %v412, 64
    %v467 = vpop.permute.xlu0 %466
    %v469 = vsel %vm418, %v410, 0
    %v472 = vsel %vm418, %v467, 0
    %474 = vmatprep.subr.bf16.mxu0 0
    %475 = vmatpush1.bf16.xpose.msra.mxu0 0
    %476 = vmatprep.subr.bf16.mxu0 0
    %477 = vmatpush1.bf16.xpose.msra.mxu0 0
    %478 = vmatprep.subr.bf16.mxu0 0
    %479 = vmatpush1.bf16.xpose.msra.mxu0 0
    %480 = vmatprep.subr.bf16.mxu0 0
    %481 = vmatpush1.bf16.xpose.msra.mxu0 0
    %482 = vmatprep.subr.bf16.mxu0 0
    %483 = vmatpush1.bf16.xpose.msra.mxu0 0
    %484 = vmatprep.subr.bf16.mxu0 0
    %485 = vmatpush1.bf16.xpose.msra.mxu0 0
    %486 = vmatprep.subr.bf16.mxu0 0
    %487 = vmatpush1.bf16.xpose.msra.mxu0 0
    %488 = vmatprep.subr.bf16.mxu0 0
    %489 = vmatpush1.bf16.xpose.msra.mxu0 %v472
    %490 = vmatprep.subr.bf16.mxu0 0
    %491 = vmatpush2.bf16.xpose.msra.mxu0 0
    %492 = vmatprep.subr.bf16.mxu0 0
    %493 = vmatpush2.bf16.xpose.msra.mxu0 0
    %494 = vmatprep.subr.bf16.mxu0 0
    %495 = vmatpush2.bf16.xpose.msra.mxu0 0
    %496 = vmatprep.subr.bf16.mxu0 0
    %497 = vmatpush2.bf16.xpose.msra.mxu0 0
    %498 = vmatprep.subr.bf16.mxu0 0
    %499 = vmatpush2.bf16.xpose.msra.mxu0 0
    %500 = vmatprep.subr.bf16.mxu0 0
    %501 = vmatpush2.bf16.xpose.msra.mxu0 0
    %502 = vmatprep.subr.bf16.mxu0 0
    %503 = vmatpush2.bf16.xpose.msra.mxu0 0
    %504 = vmatprep.subr.bf16.mxu0 0
    %505 = vmatpush2.bf16.xpose.msra.mxu0 0
    %506 = vmatprep.mubr.bf16.mxu0 0
    %507 = vmatmul.mubr.bf16.gmra.mxu0 %v469
    %v508 = vpop.f32.mrf.mxu0
    %v509 = vadd.f32 0.0, %v508
    %v510 = vpop.f32.mrf.mxu0
    %v511 = vpop.f32.mrf.mxu0
    %v512 = vpop.f32.mrf.mxu0
    %513 = vdwg.mxu0
    %v514 = vlaneseq
    %v515 = vshrl.u32 %v514, 7
    %v516 = vlaneseq
    %v517 = vand.u32 %v516, 127
    %vm518 = vcmp.le.s32.totalorder %v517, %v515
    %v519 = vsel %vm518, 1, 0
    %vm520 = vcmp.eq.s32.totalorder %v519, 1
    %v521 = vsel %vm520, %v460, -inf
    %v522 = vsel %vm520, %v509, -inf
    %vm523 = vcmask 64512
    %v524 = vsel %vm523, %v521, -inf
    %525 = vmax.xlane.f32.xlu0 %v524
    %v526 = vpop.xlane.xlu0 %525
    %v527 = vsel %vm523, %v522, -inf
    %528 = vmax.xlane.f32.xlu0 %v527
    %v529 = vpop.xlane.xlu0 %528
    %v530 = vsub.f32 %v521, %v526
    %v531 = vsub.f32 %v522, %v529
    %v532 = vmul.f32 %v530, 1.442695
    %v533 = vpow.pop %v532
    %v534 = vmul.f32 %v531, 1.442695
    %v535 = vpow.pop %v534
    %v536 = vsel %vm523, %v533, 0.0
    %537 = vadd.xlane.f32.xlu0 %v536
    %v538 = vpop.xlane.xlu0 %537
    %v539 = vsel %vm523, %v535, 0.0
    %540 = vadd.xlane.f32.xlu0 %v539
    %v541 = vpop.xlane.xlu0 %540
    %v542 = vrcp.pop %v538
    %v543 = vrcp.pop %v541
    %v544 = vmul.f32 %v533, %v542
    %v545 = vmul.f32 %v535, %v543
    %v546 = vpack.c.bf16 %v544, %v544
    %v547 = vpack.c.bf16 %v545, %v545
    %v549 = vsel %vm523, %v546, 0
    %vm551 = vcmask 1043456
    %v553 = vsel %vm551, %v413, 0
    %555 = vmatprep.subr.bf16.mxu0 0
    %556 = vmatpush1.bf16.msra.mxu0 0
    %557 = vmatprep.subr.bf16.mxu0 0
    %558 = vmatpush1.bf16.msra.mxu0 0
    %559 = vmatprep.subr.bf16.mxu0 0
    %560 = vmatpush1.bf16.msra.mxu0 0
    %561 = vmatprep.subr.bf16.mxu0 0
    %562 = vmatpush1.bf16.msra.mxu0 0
    %563 = vmatprep.subr.bf16.mxu0 0
    %564 = vmatpush1.bf16.msra.mxu0 0
    %565 = vmatprep.subr.bf16.mxu0 0
    %566 = vmatpush1.bf16.msra.mxu0 0
    %567 = vmatprep.subr.bf16.mxu0 0
    %568 = vmatpush1.bf16.msra.mxu0 0
    %569 = vmatprep.subr.bf16.mxu0 0
    %570 = vmatpush1.bf16.msra.mxu0 %v553
    %571 = vmatprep.subr.bf16.mxu0 0
    %572 = vmatpush2.bf16.msra.mxu0 0
    %573 = vmatprep.subr.bf16.mxu0 0
    %574 = vmatpush2.bf16.msra.mxu0 0
    %575 = vmatprep.subr.bf16.mxu0 0
    %576 = vmatpush2.bf16.msra.mxu0 0
    %577 = vmatprep.subr.bf16.mxu0 0
    %578 = vmatpush2.bf16.msra.mxu0 0
    %579 = vmatprep.subr.bf16.mxu0 0
    %580 = vmatpush2.bf16.msra.mxu0 0
    %581 = vmatprep.subr.bf16.mxu0 0
    %582 = vmatpush2.bf16.msra.mxu0 0
    %583 = vmatprep.subr.bf16.mxu0 0
    %584 = vmatpush2.bf16.msra.mxu0 0
    %585 = vmatprep.subr.bf16.mxu0 0
    %586 = vmatpush2.bf16.msra.mxu0 0
    %587 = vmatprep.mubr.bf16.mxu0 0
    %588 = vmatmul.mubr.bf16.gmra.mxu0 %v549
    %v589 = vpop.f32.mrf.mxu0
    %v590 = vadd.f32 0.0, %v589
    %v591 = vpop.f32.mrf.mxu0
    %v592 = vpop.f32.mrf.mxu0
    %v593 = vpop.f32.mrf.mxu0
    %594 = vdwg.mxu0
    %v596 = vsel %vm523, %v547, 0
    %v599 = vsel %vm551, %v414, 0
    %601 = vmatprep.subr.bf16.mxu0 0
    %602 = vmatpush1.bf16.msra.mxu0 0
    %603 = vmatprep.subr.bf16.mxu0 0
    %604 = vmatpush1.bf16.msra.mxu0 0
    %605 = vmatprep.subr.bf16.mxu0 0
    %606 = vmatpush1.bf16.msra.mxu0 0
    %607 = vmatprep.subr.bf16.mxu0 0
    %608 = vmatpush1.bf16.msra.mxu0 0
    %609 = vmatprep.subr.bf16.mxu0 0
    %610 = vmatpush1.bf16.msra.mxu0 0
    %611 = vmatprep.subr.bf16.mxu0 0
    %612 = vmatpush1.bf16.msra.mxu0 0
    %613 = vmatprep.subr.bf16.mxu0 0
    %614 = vmatpush1.bf16.msra.mxu0 0
    %615 = vmatprep.subr.bf16.mxu0 0
    %616 = vmatpush1.bf16.msra.mxu0 %v599
    %617 = vmatprep.subr.bf16.mxu0 0
    %618 = vmatpush2.bf16.msra.mxu0 0
    %619 = vmatprep.subr.bf16.mxu0 0
    %620 = vmatpush2.bf16.msra.mxu0 0
    %621 = vmatprep.subr.bf16.mxu0 0
    %622 = vmatpush2.bf16.msra.mxu0 0
    %623 = vmatprep.subr.bf16.mxu0 0
    %624 = vmatpush2.bf16.msra.mxu0 0
    %625 = vmatprep.subr.bf16.mxu0 0
    %626 = vmatpush2.bf16.msra.mxu0 0
    %627 = vmatprep.subr.bf16.mxu0 0
    %628 = vmatpush2.bf16.msra.mxu0 0
    %629 = vmatprep.subr.bf16.mxu0 0
    %630 = vmatpush2.bf16.msra.mxu0 0
    %631 = vmatprep.subr.bf16.mxu0 0
    %632 = vmatpush2.bf16.msra.mxu0 0
    %633 = vmatprep.mubr.bf16.mxu0 0
    %634 = vmatmul.mubr.bf16.gmra.mxu0 %v596
    %v635 = vpop.f32.mrf.mxu0
    %v636 = vadd.f32 0.0, %v635
    %v637 = vpop.f32.mrf.mxu0
    %v638 = vpop.f32.mrf.mxu0
    %v639 = vpop.f32.mrf.mxu0
    %640 = vdwg.mxu0
    %641 = vst.msk [vmem:[#allocation2] sm:$0xff] %vm418, %v590
    %642 = vst.msk [vmem:[#allocation2 + $0x8] sm:$0xff] %vm418, %v636
    // Predicated region
    $region10: #{tpu_custom_call.1} parent=1 // pred_check
      _
    $region11: #{tpu_custom_call.1} parent=1 // pred_check_branch
      %644 = sbr.rel (0) target = $region13
    $region12: #{tpu_custom_call.1} parent=1 // pred_region
      %s646 = ssub.s32 256, 256
      %647 = vsyncadd [#allocation3], %s646
      %s648 = sshll.u32 [#allocation2], 4
      %s649 = int_to_ptr.vmem [resolvable:$true] %s648
      %654 = dma.vmem_to_hbm [thread:$0]  %s649, 256, %s2, [#allocation3], 128, 128, 8
    $region13: #{tpu_custom_call.1} parent=1 // pred_fallthru
      _
    // Predicated region
    $region14: #{tpu_custom_call.1} parent=1 // pred_check
      _
    $region15: #{tpu_custom_call.1} parent=1 // pred_check_branch
      %656 = sbr.rel (0) target = $region17
    $region16: #{tpu_custom_call.1} parent=1 // pred_region
      %657 = dma.done [#allocation3], 256
    $region17: #{tpu_custom_call.1} parent=1 // pred_fallthru
      _
    %658 = vsyncpa [#allocation3], 1

</llo_original>
